<compile_context>
chip_gen: v6e
topology: v6e:2x2x1
jax: 0.10.0
libtpu: 0.0.40
codegen_flags: <defaults>
</compile_context>

<pallas_src>
from functools import partial

import jax
import jax.numpy as jnp
from jax.experimental import pallas as pl
from jax.experimental.pallas import tpu as pltpu


def _hemisphere_loss_kernel(x_ref, yth_ref, xmin_ref, psum_ref, *,
                            alpha, gamma, n_valid):
    # x_ref:   (20, TB) VMEM tile — rows 0:10 = hemisphere 0 regions,
    #                               rows 10:20 = hemisphere 1 regions.
    # yth_ref: (2, TB) dichotomized ASPECTS targets (thresholded in wrapper).
    x = x_ref[...].astype(jnp.float32)
    y_th = yth_ref[...].astype(jnp.float32)

    # torch.min(x.view(-1, 10, 2), dim=1)[0] -> sublane reduce per hemisphere.
    m0 = jnp.min(x[0:10, :], axis=0, keepdims=True)      # (1, TB)
    m1 = jnp.min(x[10:20, :], axis=0, keepdims=True)     # (1, TB)
    x_min = jnp.concatenate([m0, m1], axis=0)            # (2, TB)

    # F.binary_cross_entropy_with_logits(..., reduction='none'), stable form:
    #   max(x, 0) - x*t + log1p(exp(-|x|))
    bce = jnp.maximum(x_min, 0.0) - x_min * y_th + jnp.log1p(jnp.exp(-jnp.abs(x_min)))
    pt = jnp.exp(-bce)
    alpha_t = y_th * alpha + (1.0 - y_th) * (1.0 - alpha)
    one_minus_pt = 1.0 - pt
    if float(gamma) == 2.0:
        mod = one_minus_pt * one_minus_pt
    else:
        mod = jnp.power(one_minus_pt, gamma)
    floss = alpha_t * mod * bce                           # (2, TB)

    # Mask padded batch columns (n_valid is a static Python int) so the
    # in-kernel partial sum is exact for any alpha/gamma.
    tb = x_ref.shape[1]
    col = pl.program_id(0) * tb + jax.lax.broadcasted_iota(jnp.int32, floss.shape, 1)
    floss = jnp.where(col < n_valid, floss, 0.0)

    xmin_ref[...] = x_min.astype(xmin_ref.dtype)          # lane-dense (2, TB) store
    psum_ref[...] = jnp.sum(floss).reshape(1, 1, 1)       # per-tile partial sum


def _round_up(v, m):
    return -(-v // m) * m


def _pick_batch_tile(b, max_tb):
    """Largest lane-aligned batch tile <= max_tb; >=2 tiles for megacore when
    there is enough work (v7x has 2 TensorCores per chip)."""
    n_tiles = -(-b // max_tb)
    if b >= 256:
        n_tiles = max(n_tiles, 2)
    return _round_up(-(-b // n_tiles), 128)


def hemisphere_detect_loss(x, y, alpha=1.0, gamma=2.0, max_batch_tile=32768):
    """Returns (focal_loss_scalar, x_min (B, 2)) matching HemisphereDetectLoss.forward."""
    x3 = x.reshape(-1, 10, 2)
    y3 = y.reshape(-1, 10, 2)
    assert x3.shape == y3.shape
    B = x3.shape[0]

    # get_dichotomized_ASPECTS done in the wrapper: one pass over y that emits
    # only a tiny (2, B) array, so the kernel never streams the full y tensor.
    y_th = (jnp.sum(y3.astype(jnp.float32), axis=1) >= 10.0).astype(jnp.float32)  # (B, 2)
    y_th_t = jnp.transpose(y_th, (1, 0))                                          # (2, B)

    # Lane-dense x layout: (hemisphere*region, batch) = (20, B); batch on lanes.
    xt = jnp.transpose(x3, (2, 1, 0)).reshape(20, B)

    TB = _pick_batch_tile(B, max_batch_tile)
    B_pad = _round_up(B, TB)
    if B_pad != B:
        xt = jnp.pad(xt, ((0, 0), (0, B_pad - B)))
        y_th_t = jnp.pad(y_th_t, ((0, 0), (0, B_pad - B)))
    n_tiles = B_pad // TB

    kernel = partial(_hemisphere_loss_kernel, alpha=float(alpha),
                     gamma=float(gamma), n_valid=B)
    cost = pl.CostEstimate(
        flops=60 * B_pad,
        transcendentals=6 * B_pad,
        bytes_accessed=(20 + 2 + 2) * B_pad * 4 + n_tiles * 4,
    )

    x_min_t, psum = pl.pallas_call(
        kernel,
        grid=(n_tiles,),
        out_shape=(
            jax.ShapeDtypeStruct((2, B_pad), x.dtype),       # per-hemisphere min logits
            jax.ShapeDtypeStruct((n_tiles, 1, 1), jnp.float32),  # per-tile loss partials
        ),
        in_specs=[
            pl.BlockSpec((20, TB), lambda i: (0, i)),
            pl.BlockSpec((2, TB), lambda i: (0, i)),
        ],
        out_specs=(
            pl.BlockSpec((2, TB), lambda i: (0, i)),
            pl.BlockSpec((1, 1, 1), lambda i: (i, 0, 0)),
        ),
        compiler_params=pltpu.CompilerParams(
            dimension_semantics=("parallel",),
        ),
        cost_estimate=cost,
    )(xt, y_th_t)

    # Tiny finish in the wrapper: sum n_tiles partials, normalize by 2*B.
    loss = jnp.sum(psum) / (B * 2)
    x_min = jnp.transpose(x_min_t[:, :B], (1, 0))            # back to (B, 2) like torch
    return loss, x_min


def _reference(x, y, alpha=1.0, gamma=2.0):
    x3 = x.reshape(-1, 10, 2).astype(jnp.float32)
    y3 = y.reshape(-1, 10, 2).astype(jnp.float32)
    y_th = (jnp.sum(y3, axis=1) >= 10.0).astype(jnp.float32)
    xm = jnp.min(x3, axis=1)
    bce = jnp.maximum(xm, 0.0) - xm * y_th + jnp.log1p(jnp.exp(-jnp.abs(xm)))
    pt = jnp.exp(-bce)
    alpha_t = y_th * alpha + (1.0 - y_th) * (1.0 - alpha)
    f_loss = alpha_t * (1.0 - pt) ** gamma * bce
    return jnp.mean(f_loss), xm


if __name__ == "__main__":
    key = jax.random.PRNGKey(0)
    kx, ky, kx2, ky2 = jax.random.split(key, 4)

    # Small case (B=2): single batch tile (batch padded to one 128-lane tile).
    B = 2
    x = jax.random.normal(kx, (B, 20), dtype=jnp.float32)
    y = jax.random.randint(ky, (B, 20), 0, 2).astype(jnp.float32)
    y = y.at[0].set(1.0)  # batch 0: perfect ASPECTS so the >=10 threshold fires

    loss, x_min = hemisphere_detect_loss(x, y)
    jax.block_until_ready((loss, x_min))

    ref_loss, ref_xmin = _reference(x, y)
    assert loss.shape == () and x_min.shape == (B, 2)
    assert jnp.allclose(loss, ref_loss, atol=1e-5, rtol=1e-5), (loss, ref_loss)
    assert jnp.allclose(x_min, ref_xmin, atol=1e-6), (x_min, ref_xmin)

    # Multi-tile case: small batch tile forces the grid + padding path.
    B2 = 300
    x2 = jax.random.normal(kx2, (B2, 20), dtype=jnp.float32)
    y2 = jax.random.randint(ky2, (B2, 20), 0, 2).astype(jnp.float32)
    y2 = y2.at[0].set(1.0)

    loss2, x_min2 = hemisphere_detect_loss(x2, y2, max_batch_tile=128)
    jax.block_until_ready((loss2, x_min2))
    ref_loss2, ref_xmin2 = _reference(x2, y2)
    assert loss2.shape == () and x_min2.shape == (B2, 2)
    assert jnp.allclose(loss2, ref_loss2, atol=1e-5, rtol=1e-5), (loss2, ref_loss2)
    assert jnp.allclose(x_min2, ref_xmin2, atol=1e-6), (x_min2, ref_xmin2)

    # Non-default alpha: exercises the in-kernel padded-lane masking (padded
    # columns would otherwise leak a nonzero loss into the partial sums).
    loss3, x_min3 = hemisphere_detect_loss(x2, y2, alpha=0.25, gamma=2.0,
                                           max_batch_tile=128)
    jax.block_until_ready((loss3, x_min3))
    ref_loss3, ref_xmin3 = _reference(x2, y2, alpha=0.25, gamma=2.0)
    assert jnp.allclose(loss3, ref_loss3, atol=1e-5, rtol=1e-5), (loss3, ref_loss3)
    assert jnp.allclose(x_min3, ref_xmin3, atol=1e-6)

    print("KERNEL_OK")
</pallas_src>

<mosaic_0001>
module attributes {stable_mosaic.version = 11 : i64} {
  func.func @_hemisphere_loss_kernel(%arg0: i32, %arg1: memref<20x128xf32, #tpu.memory_space<vmem>>, %arg2: memref<2x128xf32, #tpu.memory_space<vmem>>, %arg3: memref<2x128xf32, #tpu.memory_space<vmem>>, %arg4: memref<1x1x1xf32, #tpu.memory_space<vmem>>) attributes {dimension_semantics = [#tpu.dimension_semantics<parallel>], iteration_bounds = array<i64: 1>, scalar_prefetch = 0 : i64, scratch_operands = 0 : i64, tpu.core_type = #tpu.core_type<tc>, window_params = [{transform_indices = @transform_0, window_bounds = array<i64: 20, 128>}, {transform_indices = @transform_1, window_bounds = array<i64: 2, 128>}, {transform_indices = @transform_2, window_bounds = array<i64: 2, 128>}, {transform_indices = @transform_3, window_bounds = array<i64: 1, 1, 1>}]} {
    %c0 = arith.constant 0 : index
    %c0_0 = arith.constant 0 : index
    %0 = vector.load %arg1[%c0, %c0_0] : memref<20x128xf32, #tpu.memory_space<vmem>>, vector<20x128xf32>
    %c0_1 = arith.constant 0 : index
    %c0_2 = arith.constant 0 : index
    %1 = vector.load %arg2[%c0_1, %c0_2] : memref<2x128xf32, #tpu.memory_space<vmem>>, vector<2x128xf32>
    %2 = vector.extract_strided_slice %0 {offsets = [0, 0], sizes = [10, 128], strides = [1, 1]} : vector<20x128xf32> to vector<10x128xf32>
    %cst = arith.constant dense<0x7F800000> : vector<128xf32>
    %3 = vector.multi_reduction <minimumf>, %2, %cst [0] : vector<10x128xf32> to vector<128xf32>
    %4 = vector.shape_cast %3 : vector<128xf32> to vector<1x128xf32>
    %5 = vector.extract_strided_slice %0 {offsets = [10, 0], sizes = [10, 128], strides = [1, 1]} : vector<20x128xf32> to vector<10x128xf32>
    %cst_3 = arith.constant dense<0x7F800000> : vector<128xf32>
    %6 = vector.multi_reduction <minimumf>, %5, %cst_3 [0] : vector<10x128xf32> to vector<128xf32>
    %7 = vector.shape_cast %6 : vector<128xf32> to vector<1x128xf32>
    %8 = tpu.concatenate %4, %7 in 0 : vector<1x128xf32>, vector<1x128xf32> -> vector<2x128xf32>
    %cst_4 = arith.constant 0.000000e+00 : f32
    %9 = vector.broadcast %cst_4 : f32 to vector<2x128xf32>
    %10 = arith.maximumf %8, %9 : vector<2x128xf32>
    %11 = arith.mulf %8, %1 : vector<2x128xf32>
    %12 = arith.subf %10, %11 : vector<2x128xf32>
    %13 = math.absf %8 : vector<2x128xf32>
    %cst_5 = arith.constant 0.000000e+00 : f32
    %14 = vector.broadcast %cst_5 : f32 to vector<2x128xf32>
    %15 = arith.subf %14, %13 : vector<2x128xf32>
    %16 = math.exp %15 : vector<2x128xf32>
    %17 = math.log1p %16 : vector<2x128xf32>
    %18 = arith.addf %12, %17 : vector<2x128xf32>
    %cst_6 = arith.constant 0.000000e+00 : f32
    %19 = vector.broadcast %cst_6 : f32 to vector<2x128xf32>
    %20 = arith.subf %19, %18 : vector<2x128xf32>
    %21 = math.exp %20 : vector<2x128xf32>
    %cst_7 = arith.constant 1.000000e+00 : f32
    %22 = vector.broadcast %cst_7 : f32 to vector<2x128xf32>
    %23 = arith.mulf %1, %22 : vector<2x128xf32>
    %cst_8 = arith.constant 1.000000e+00 : f32
    %24 = vector.broadcast %cst_8 : f32 to vector<2x128xf32>
    %25 = arith.subf %24, %1 : vector<2x128xf32>
    %cst_9 = arith.constant 0.000000e+00 : f32
    %26 = vector.broadcast %cst_9 : f32 to vector<2x128xf32>
    %27 = arith.mulf %25, %26 : vector<2x128xf32>
    %28 = arith.addf %23, %27 : vector<2x128xf32>
    %cst_10 = arith.constant 1.000000e+00 : f32
    %29 = vector.broadcast %cst_10 : f32 to vector<2x128xf32>
    %30 = arith.subf %29, %21 : vector<2x128xf32>
    %31 = arith.mulf %30, %30 : vector<2x128xf32>
    %32 = arith.mulf %28, %31 : vector<2x128xf32>
    %33 = arith.mulf %32, %18 : vector<2x128xf32>
    %c128_i32 = arith.constant 128 : i32
    %34 = arith.muli %arg0, %c128_i32 : i32
    %35 = tpu.iota {dimensions = array<i32: 1>} : vector<2x128xi32>
    %36 = vector.broadcast %34 : i32 to vector<2x128xi32>
    %37 = arith.addi %36, %35 : vector<2x128xi32>
    %c2_i32 = arith.constant 2 : i32
    %38 = vector.broadcast %c2_i32 : i32 to vector<2x128xi32>
    %39 = arith.cmpi slt, %37, %38 : vector<2x128xi32>
    %cst_11 = arith.constant 0.000000e+00 : f32
    %40 = vector.broadcast %cst_11 : f32 to vector<2x128xf32>
    %41 = arith.select %39, %33, %40 : vector<2x128xi1>, vector<2x128xf32>
    %c0_12 = arith.constant 0 : index
    %c0_13 = arith.constant 0 : index
    %42 = vector.load %arg3[%c0_12, %c0_13] : memref<2x128xf32, #tpu.memory_space<vmem>>, vector<2x128xf32>
    tpu.vector_store %arg3[%c0_12, %c0_13], %8 {strides = array<i32>} : memref<2x128xf32, #tpu.memory_space<vmem>>, vector<2x128xf32>,
    %43 = vector.shape_cast %41 : vector<2x128xf32> to vector<1x2x128xf32>
    %cst_14 = arith.constant dense<0.000000e+00> : vector<1xf32>
    %44 = vector.multi_reduction <add>, %43, %cst_14 [1, 2] : vector<1x2x128xf32> to vector<1xf32>
    %45 = vector.shape_cast %44 : vector<1xf32> to vector<1x1x1xf32>
    %46 = vector.extract %45[0, 0, 0] : f32 from vector<1x1x1xf32>
    %47 = vector.broadcast %46 : f32 to vector<1x1x1xf32>
    %c0_15 = arith.constant 0 : index
    %c0_16 = arith.constant 0 : index
    %c0_17 = arith.constant 0 : index
    %48 = vector.load %arg4[%c0_15, %c0_16, %c0_17] : memref<1x1x1xf32, #tpu.memory_space<vmem>>, vector<1x1x1xf32>
    tpu.vector_store %arg4[%c0_15, %c0_16, %c0_17], %47 {strides = array<i32>} : memref<1x1x1xf32, #tpu.memory_space<vmem>>, vector<1x1x1xf32>,
    return
  }
  func.func @transform_0(%arg0: i32) -> (i32, i32) {
    %c0_i32 = arith.constant 0 : i32
    %c0_i32_0 = arith.constant 0 : i32
    return %c0_i32, %arg0 : i32, i32
  }
  func.func @transform_1(%arg0: i32) -> (i32, i32) {
    %c0_i32 = arith.constant 0 : i32
    %c0_i32_0 = arith.constant 0 : i32
    return %c0_i32, %arg0 : i32, i32
  }
  func.func @transform_2(%arg0: i32) -> (i32, i32) {
    %c0_i32 = arith.constant 0 : i32
    %c0_i32_0 = arith.constant 0 : i32
    return %c0_i32, %arg0 : i32, i32
  }
  func.func @transform_3(%arg0: i32) -> (i32, i32, i32) {
    %c0_i32 = arith.constant 0 : i32
    %c0_i32_0 = arith.constant 0 : i32
    %c0_i32_1 = arith.constant 0 : i32
    return %arg0, %c0_i32, %c0_i32_0 : i32, i32, i32
  }
}

</mosaic_0001>

<llo_original>
// kernel: tpu_custom_call.1
$region0: #{tpu_custom_call.1}
  #allocation0 [shape = 'u32[]', space=smem, size = 0x4, offset = 0x4, fixed_abs, tag = 'smem constant byte address 0x4 - core index']
  #allocation1 [shape = 'u32[144,128]{1,0:T(1,128)}', space=vmem, size = 0x12000, scoped, tag = 'internal scratch']
  %s0 = inlined_call_operand.hbm [shape: f32[20,128], index: 0, kind: input, shape index: {}]
  %s1 = inlined_call_operand.hbm [shape: f32[2,128], index: 1, kind: input, shape index: {}]
  %s2 = inlined_call_operand.hbm [shape: f32[2,128], index: 2, kind: output, shape index: {0}]
  %s3 = inlined_call_operand.hbm [shape: f32[1,1,1], index: 3, kind: output, shape index: {1}]
  %4 = xla_tuple %s2, %s3
  %s5 = sld [smem:[#allocation0]]
  $region34: #{tpu_custom_call.1} parent=0
    _
  %s7 = ssub.s32 1, %s5
  %s8 = scalar_select 0, %s7, %s5
  $region1: #{tpu_custom_call.1} parent=0
    #allocation2 [shape = 'u8[12288]{0}', space=vmem, size = 0x3000, scoped, tag = 'input window, operand 0, single buffered']
    #allocation3 [shape = 's32[1]{0}', space=sflag, size = 0x4, scoped, tag = 'scoped memory for tpu_custom_call.1']
    #allocation4 [shape = 's32[1]{0}', space=sflag, size = 0x4, scoped, tag = 'scoped memory for tpu_custom_call.1']
    #allocation5 [shape = 'u8[1024]{0}', space=vmem, size = 0x400, scoped, tag = 'input window, operand 1, single buffered']
    #allocation6 [shape = 's32[1]{0}', space=sflag, size = 0x4, scoped, tag = 'scoped memory for tpu_custom_call.1']
    #allocation7 [shape = 'u8[1024]{0}', space=vmem, size = 0x400, scoped, tag = 'output window, operand 0, single buffered']
    #allocation8 [shape = 'u8[512]{0}', space=vmem, size = 0x400, scoped, tag = 'output window, operand 1, single buffered']
    #allocation9 [shape = 's32[1]{0}', space=sflag, size = 0x4, scoped, tag = 'scoped memory for tpu_custom_call.1']
    %9 = vsyncpa [#allocation3], 0
    %10 = vsyncpa [#allocation6], 0
    %11 = vsyncpa [#allocation4], 0
    %12 = vsyncpa [#allocation9], 0
    // Predicated region
    $region2: #{tpu_custom_call.1} parent=1 // pred_check
      _
    $region3: #{tpu_custom_call.1} parent=1 // pred_check_branch
      %14 = sbr.rel (0) target = $region5
    $region4: #{tpu_custom_call.1} parent=1 // pred_region
      %s16 = ssub.s32 384, 384
      %17 = vsyncadd [#allocation3], %s16
      %s18 = sshll.u32 [#allocation2], 4
      %s19 = int_to_ptr.vmem [resolvable:$true] %s18
      %24 = dma.hbm_to_vmem [thread:$0]  %s0, 384, %s19, [#allocation3], 128, 128, 8
    $region5: #{tpu_custom_call.1} parent=1 // pred_fallthru
      _
    // Predicated region
    $region6: #{tpu_custom_call.1} parent=1 // pred_check
      _
    $region7: #{tpu_custom_call.1} parent=1 // pred_check_branch
      %26 = sbr.rel (0) target = $region9
    $region8: #{tpu_custom_call.1} parent=1 // pred_region
      %s28 = ssub.s32 32, 32
      %29 = vsyncadd [#allocation6], %s28
      %s31 = sshll.u32 [#allocation5], 4
      %s32 = int_to_ptr.vmem [resolvable:$true] %s31
      %34 = dma.hbm_to_vmem [thread:$0]  %s1, 32, %s32, [#allocation6]
    $region9: #{tpu_custom_call.1} parent=1 // pred_fallthru
      _
    // Predicated region
    $region10: #{tpu_custom_call.1} parent=1 // pred_check
      _
    $region11: #{tpu_custom_call.1} parent=1 // pred_check_branch
      %36 = sbr.rel (0) target = $region13
    $region12: #{tpu_custom_call.1} parent=1 // pred_region
      %37 = dma.done [#allocation3], 384
    $region13: #{tpu_custom_call.1} parent=1 // pred_fallthru
      _
    // Predicated region
    $region14: #{tpu_custom_call.1} parent=1 // pred_check
      _
    $region15: #{tpu_custom_call.1} parent=1 // pred_check_branch
      %39 = sbr.rel (0) target = $region17
    $region16: #{tpu_custom_call.1} parent=1 // pred_region
      %40 = dma.done [#allocation6], 32
    $region17: #{tpu_custom_call.1} parent=1 // pred_fallthru
      _
    %v41 = vld [vmem:[#allocation2] sm:$0xff]
    %v42 = vld [vmem:[#allocation2 + $0x8] sm:$0xff]
    %v43 = vld [vmem:[#allocation2 + $0x10] sm:$0xf]
    %v44 = vld [vmem:[#allocation5] sm:$0x3]
    %vm45 = vcmask 1041408
    %v46 = vsel %vm45, %v42, inf
    %v47 = vmin.f32 %v41, %v46
    %v48 = vrot.slane %v47, 4
    %v49 = vmin.f32 %v47, %v48
    %v50 = vrot.slane %v49, 2
    %v51 = vmin.f32 %v49, %v50
    %v52 = vrot.slane %v51, 1
    %v53 = vmin.f32 %v51, %v52
    %vm54 = vcmask 1047554
    %v55 = vsel %vm54, %v42, inf
    %vm56 = vcmask 1043456
    %v57 = vsel %vm56, %v43, inf
    %v58 = vmin.f32 %v55, %v57
    %v59 = vrot.slane %v58, 4
    %v60 = vmin.f32 %v58, %v59
    %v61 = vrot.slane %v60, 2
    %v62 = vmin.f32 %v60, %v61
    %v63 = vrot.slane %v62, 1
    %v64 = vmin.f32 %v62, %v63
    %vm65 = vcmask 1040384
    %v66 = vsel %vm65, %v53, %v64
    %v67 = vmax.f32 %v66, 0.0
    %v68 = vmul.f32 %v66, %v44
    %v69 = vsub.f32 %v67, %v68
    %v70 = vand.u32 2147483647, %v66
    %v71 = vsub.f32 0.0, %v70
    %v72 = vmul.f32 %v71, 1.442695
    %v73 = vpow.pop %v72
    %v74 = vadd.f32 %v73, 1.0
    %v75 = vlog2.pop %v74
    %v76 = vmul.f32 %v75, 0.6931472
    %v77 = vmul.f32 -0.5, %v73
    %v78 = vadd.f32 %v77, 1.0
    %v79 = vmul.f32 %v78, %v73
    %v80 = vand.u32 2147483647, %v73
    %vm81 = vcmp.lt.f32.partialorder %v80, 0.0004427343
    %v82 = vsel %vm81, %v79, %v76
    %v83 = vadd.f32 %v69, %v82
    %v84 = vsub.f32 0.0, %v83
    %v85 = vmul.f32 %v84, 1.442695
    %v86 = vpow.pop %v85
    %v87 = vsub.f32 1.0, %v44
    %v88 = vmul.f32 %v87, 0.0
    %v89 = vadd.f32 %v44, %v88
    %v90 = vsub.f32 1.0, %v86
    %v91 = vmul.f32 %v90, %v90
    %v92 = vmul.f32 %v89, %v91
    %v93 = vmul.f32 %v92, %v83
    %s94 = smul.u32 0, 128
    %v95 = vlaneseq
    %v96 = vand.u32 %v95, 127
    %v97 = vstv %s94
    %v98 = vadd.s32 %v97, %v96
    %vm99 = vcmp.lt.s32.totalorder %v98, 2
    %v100 = vsel %vm99, %v93, 0.0
    %101 = vst [vmem:[#allocation7] sm:$0x3] %v66
    %v102 = vsel %vm45, %v100, 0.0
    %103 = vadd.xlane.f32.xlu0 %v102
    %v104 = vpop.xlane.xlu0 %103
    %v105 = vrot.slane %v104, 4
    %v106 = vadd.f32 %v104, %v105
    %v107 = vrot.slane %v106, 2
    %v108 = vadd.f32 %v106, %v107
    %v109 = vrot.slane %v108, 1
    %v110 = vadd.f32 %v108, %v109
    %s111 = vtos %v110
    %v112 = vstv %s111
    %vm113 = vcmask 0
    %114 = vst.msk [vmem:[#allocation8] sm:$0x1] %vm113, %v112
    // Predicated region
    $region18: #{tpu_custom_call.1} parent=1 // pred_check
      _
    $region19: #{tpu_custom_call.1} parent=1 // pred_check_branch
      %116 = sbr.rel (0) target = $region21
    $region20: #{tpu_custom_call.1} parent=1 // pred_region
      %s118 = ssub.s32 32, 32
      %119 = vsyncadd [#allocation4], %s118
      %s121 = sshll.u32 [#allocation7], 4
      %s122 = int_to_ptr.vmem [resolvable:$true] %s121
      %124 = dma.vmem_to_hbm [thread:$0]  %s122, 32, %s2, [#allocation4]
    $region21: #{tpu_custom_call.1} parent=1 // pred_fallthru
      _
    // Predicated region
    $region22: #{tpu_custom_call.1} parent=1 // pred_check
      _
    $region23: #{tpu_custom_call.1} parent=1 // pred_check_branch
      %126 = sbr.rel (0) target = $region25
    $region24: #{tpu_custom_call.1} parent=1 // pred_region
      %s128 = ssub.s32 16, 16
      %129 = vsyncadd [#allocation9], %s128
      %s131 = sshll.u32 [#allocation8], 4
      %s132 = int_to_ptr.vmem [resolvable:$true] %s131
      %134 = dma.vmem_to_hbm [thread:$0]  %s132, 16, %s3, [#allocation9]
    $region25: #{tpu_custom_call.1} parent=1 // pred_fallthru
      _
    // Predicated region
    $region26: #{tpu_custom_call.1} parent=1 // pred_check
      _
    $region27: #{tpu_custom_call.1} parent=1 // pred_check_branch
      %136 = sbr.rel (0) target = $region29
    $region28: #{tpu_custom_call.1} parent=1 // pred_region
      %137 = dma.done [#allocation4], 32
    $region29: #{tpu_custom_call.1} parent=1 // pred_fallthru
      _
    // Predicated region
    $region30: #{tpu_custom_call.1} parent=1 // pred_check
      _
    $region31: #{tpu_custom_call.1} parent=1 // pred_check_branch
      %139 = sbr.rel (0) target = $region33
    $region32: #{tpu_custom_call.1} parent=1 // pred_region
      %140 = dma.done [#allocation9], 16
    $region33: #{tpu_custom_call.1} parent=1 // pred_fallthru
      _
    %141 = vsyncpa [#allocation3], 1
    %142 = vsyncpa [#allocation6], 1
    %143 = vsyncpa [#allocation4], 1
    %144 = vsyncpa [#allocation9], 1

</llo_original>
